<compile_context>
chip_gen: v7x
topology: tpu7x:2x2x1
jax: 0.10.0
libtpu: 0.0.40
codegen_flags: <defaults>
</compile_context>

<pallas_src>
import functools
import math

import jax
import jax.numpy as jnp
from jax.experimental import pallas as pl
from jax.experimental.pallas import tpu as pltpu

LANE = 128
_SPLIT_ROWS = 256      # batches with >= this many (rounded) rows are split into
                       # >=2 grid steps so both v7x TensorCores get work.


def _round_up(n, m):
    return ((n + m - 1) // m) * m


def _sublane(dtype):
    # A bf16/f16 vreg holds [16,128]; 32-bit holds [8,128].
    return 16 if jnp.dtype(dtype).itemsize == 2 else 8


def _const_spec(shape):
    """BlockSpec for a VMEM-resident constant (same block every step)."""
    try:
        return pl.BlockSpec(shape, lambda i: (0, 0),
                            pipeline_mode=pl.Buffered(1))
    except TypeError:  # older JAX without pipeline_mode kwarg
        return pl.BlockSpec(shape, lambda i: (0, 0))


# ----------------------------------------------------------------------------
# Kernel
# ----------------------------------------------------------------------------
def _mlp_kernel(x_ref, *refs):
    """Fused MLP forward for one batch tile.

    refs = (w0, b0, w1, b1, ..., wL, bL, out_ref).
    Hidden layers get ReLU; the final layer is a bare Linear (matches the
    PyTorch nn.Sequential).  Weights/activations may be bf16 (MXU inputs);
    accumulation, bias add and ReLU are always f32.
    """
    out_ref = refs[-1]
    params = refs[:-1]
    n_layers = len(params) // 2

    mxu_dtype = x_ref.dtype
    h = x_ref[...]
    for l in range(n_layers):
        w = params[2 * l][...]                     # (in_p, out_p), mxu_dtype
        b = params[2 * l + 1][...]                 # (1, out_p), f32
        acc = jnp.dot(h, w, preferred_element_type=jnp.float32) + b
        if l < n_layers - 1:
            acc = jnp.maximum(acc, 0.0)            # ReLU in f32 (VPU)
            h = acc.astype(mxu_dtype)              # narrow only for next MXU
        else:
            h = acc
    out_ref[...] = h.astype(out_ref.dtype)


# ----------------------------------------------------------------------------
# Host-side setup (done once) + jitted forward
# ----------------------------------------------------------------------------
def prepare_params(weights, biases, compute_dtype=jnp.bfloat16):
    """Zero-pad every feature dim to a multiple of 128, once.

    weights[i]: (in_i, out_i)  (transpose of torch's nn.Linear weight);
    biases[i]: (out_i,).  Zero padding is numerically exact for this
    Linear+ReLU chain; real columns are sliced off after the kernel.
    Returns (flat_params, out_size).
    """
    sizes = [weights[0].shape[0]] + [w.shape[1] for w in weights]
    padded = [_round_up(s, LANE) for s in sizes]
    flat = []
    for l, (w, b) in enumerate(zip(weights, biases)):
        w_p = jnp.zeros((padded[l], padded[l + 1]), compute_dtype)
        w_p = w_p.at[:w.shape[0], :w.shape[1]].set(w.astype(compute_dtype))
        b_p = jnp.zeros((1, padded[l + 1]), jnp.float32)
        b_p = b_p.at[0, :b.shape[0]].set(b.astype(jnp.float32))
        flat += [w_p, b_p]
    return tuple(flat), sizes[-1]


@functools.partial(jax.jit, static_argnames=("out_size", "tile_b", "out_dtype"))
def neuro_behaviour_forward(x, flat_params, *, out_size, tile_b=1024,
                            out_dtype=jnp.float32):
    """x: (B, input_size); flat_params from prepare_params().

    Computes Linear->ReLU->...->Linear.  The MXU input dtype is taken from
    the prepared parameters (bf16 by default); accumulation is f32.
    """
    B, in_size = x.shape
    compute_dtype = flat_params[0].dtype
    n_layers = len(flat_params) // 2
    in_pad = flat_params[0].shape[0]
    out_pad = flat_params[-2].shape[1]

    # ---- batch tile selection --------------------------------------------
    sub = _sublane(compute_dtype)
    B_sub = _round_up(B, sub)
    tile = min(B_sub, _round_up(tile_b, sub))
    if tile == B_sub and B_sub >= 2 * _SPLIT_ROWS:
        # Large single-step batch: split so >=2 parallel steps (v7x megacore).
        tile = _round_up((B_sub + 1) // 2, sub)
    B_pad = _round_up(B, tile)

    # ---- input: cast + pad only if needed ---------------------------------
    x_c = x.astype(compute_dtype)
    if B_pad != B or in_pad != in_size:
        x_c = jnp.pad(x_c, ((0, B_pad - B), (0, in_pad - in_size)))

    # ---- specs --------------------------------------------------------------
    in_specs = [pl.BlockSpec((tile, in_pad), lambda i: (i, 0))]
    for p in flat_params:
        in_specs.append(_const_spec(p.shape))     # resident, single-buffered
    out_spec = pl.BlockSpec((tile, out_pad), lambda i: (i, 0))

    # ---- cost estimate & VMEM budget ---------------------------------------
    cd_bytes = jnp.dtype(compute_dtype).itemsize
    od_bytes = jnp.dtype(out_dtype).itemsize
    param_bytes = sum(math.prod(p.shape) * p.dtype.itemsize for p in flat_params)
    flops = 2 * B_pad * sum(flat_params[2 * l].shape[0] * flat_params[2 * l].shape[1]
                            for l in range(n_layers))
    bytes_accessed = (B_pad * in_pad * cd_bytes + param_bytes
                      + B_pad * out_pad * od_bytes)
    cost = pl.CostEstimate(flops=flops, transcendentals=0,
                           bytes_accessed=bytes_accessed)

    widest = max([in_pad, out_pad]
                 + [flat_params[2 * l].shape[1] for l in range(n_layers)])
    budget = (param_bytes                              # resident params (x1)
              + 2 * tile * in_pad * cd_bytes           # double-buffered x tile
              + 2 * tile * out_pad * od_bytes          # double-buffered out tile
              + 3 * tile * widest * 4)                 # f32 activation temps
    vmem_limit = int(min(max(2 * budget, 8 * 2 ** 20), 64 * 2 ** 20))

    fn = pl.pallas_call(
        _mlp_kernel,
        out_shape=jax.ShapeDtypeStruct((B_pad, out_pad), out_dtype),
        grid_spec=pltpu.PrefetchScalarGridSpec(
            num_scalar_prefetch=0,
            grid=(B_pad // tile,),
            in_specs=in_specs,
            out_specs=out_spec,
        ),
        compiler_params=pltpu.CompilerParams(
            dimension_semantics=("parallel",),
            vmem_limit_bytes=vmem_limit),
        cost_estimate=cost,
    )
    out = fn(x_c, *flat_params)
    return out[:B, :out_size]


# ----------------------------------------------------------------------------
# Reference / init helpers
# ----------------------------------------------------------------------------
def init_params(key, input_size, hidden_sizes, output_size):
    """Deterministic parameter init (uniform, PyTorch-Linear-style bounds)."""
    sizes = [input_size] + list(hidden_sizes) + [output_size]
    weights, biases = [], []
    for i in range(len(sizes) - 1):
        fan_in, fan_out = sizes[i], sizes[i + 1]
        key, kw, kb = jax.random.split(key, 3)
        bound = 1.0 / (fan_in ** 0.5)
        # Stored as (in, out) == transpose of torch's (out, in) weight.
        weights.append(jax.random.uniform(kw, (fan_in, fan_out), jnp.float32,
                                          -bound, bound))
        biases.append(jax.random.uniform(kb, (fan_out,), jnp.float32,
                                         -bound, bound))
    return weights, biases


def reference_forward(x, weights, biases):
    h = x
    for i, (w, b) in enumerate(zip(weights, biases)):
        h = h @ w + b
        if i < len(weights) - 1:
            h = jnp.maximum(h, 0.0)
    return h


if __name__ == "__main__":
    # Small shapes implied by the module: flat feature vectors through an MLP.
    input_size = 32
    hidden_sizes = [64, 48]
    output_size = 16
    batch = 16

    key = jax.random.PRNGKey(0)
    key, kx = jax.random.split(key)
    x = jax.random.normal(kx, (batch, input_size), jnp.float32)
    weights, biases = init_params(key, input_size, hidden_sizes, output_size)

    ref = reference_forward(x, weights, biases)

    # f32 MXU path (exact vs reference).
    params_f32, out_size = prepare_params(weights, biases,
                                          compute_dtype=jnp.float32)
    out_f32 = jax.block_until_ready(
        neuro_behaviour_forward(x, params_f32, out_size=out_size))
    assert out_f32.shape == (batch, output_size)
    assert jnp.allclose(out_f32, ref, atol=1e-4, rtol=1e-4), "f32 mismatch"

    # bf16 MXU-input path (default for deployment); f32 accumulation.
    params_bf16, _ = prepare_params(weights, biases)   # bf16 by default
    out_bf16 = jax.block_until_ready(
        neuro_behaviour_forward(x, params_bf16, out_size=out_size))
    assert out_bf16.shape == (batch, output_size)
    assert jnp.allclose(out_bf16, ref, atol=1e-1, rtol=1e-1), "bf16 mismatch"

    print("KERNEL_OK")
</pallas_src>

<mosaic_0001>
module attributes {stable_mosaic.version = 11 : i64} {
  func.func @_mlp_kernel(%arg0: i32, %arg1: memref<16x128xf32, #tpu.memory_space<vmem>>, %arg2: memref<128x128xf32, #tpu.memory_space<vmem>>, %arg3: memref<1x128xf32, #tpu.memory_space<vmem>>, %arg4: memref<128x128xf32, #tpu.memory_space<vmem>>, %arg5: memref<1x128xf32, #tpu.memory_space<vmem>>, %arg6: memref<128x128xf32, #tpu.memory_space<vmem>>, %arg7: memref<1x128xf32, #tpu.memory_space<vmem>>, %arg8: memref<16x128xf32, #tpu.memory_space<vmem>>) attributes {dimension_semantics = [#tpu.dimension_semantics<parallel>], iteration_bounds = array<i64: 1>, scalar_prefetch = 0 : i64, scratch_operands = 0 : i64, tpu.core_type = #tpu.core_type<tc>, window_params = [{transform_indices = @transform_0, window_bounds = array<i64: 16, 128>}, {pipeline_mode = #tpu.pipeline_mode<synchronous>, transform_indices = @transform_1, window_bounds = array<i64: 128, 128>}, {pipeline_mode = #tpu.pipeline_mode<synchronous>, transform_indices = @transform_2, window_bounds = array<i64: 1, 128>}, {pipeline_mode = #tpu.pipeline_mode<synchronous>, transform_indices = @transform_3, window_bounds = array<i64: 128, 128>}, {pipeline_mode = #tpu.pipeline_mode<synchronous>, transform_indices = @transform_4, window_bounds = array<i64: 1, 128>}, {pipeline_mode = #tpu.pipeline_mode<synchronous>, transform_indices = @transform_5, window_bounds = array<i64: 128, 128>}, {pipeline_mode = #tpu.pipeline_mode<synchronous>, transform_indices = @transform_6, window_bounds = array<i64: 1, 128>}, {transform_indices = @transform_7, window_bounds = array<i64: 16, 128>}]} {
    %c0 = arith.constant 0 : index
    %c0_0 = arith.constant 0 : index
    %0 = vector.load %arg1[%c0, %c0_0] : memref<16x128xf32, #tpu.memory_space<vmem>>, vector<16x128xf32>
    %c0_1 = arith.constant 0 : index
    %c0_2 = arith.constant 0 : index
    %1 = vector.load %arg2[%c0_1, %c0_2] : memref<128x128xf32, #tpu.memory_space<vmem>>, vector<128x128xf32>
    %c0_3 = arith.constant 0 : index
    %c0_4 = arith.constant 0 : index
    %2 = vector.load %arg3[%c0_3, %c0_4] : memref<1x128xf32, #tpu.memory_space<vmem>>, vector<1x128xf32>
    %cst = arith.constant dense<0.000000e+00> : vector<16x128xf32>
    %3 = tpu.matmul %0, %1, %cst {dimension_numbers = #tpu.dot_dimension_numbers<[1], [0], [0], [1], [0, 0, 1, 1], [], []>} : vector<16x128xf32>, vector<128x128xf32>, vector<16x128xf32> -> vector<16x128xf32>
    %4 = vector.broadcast %2 : vector<1x128xf32> to vector<16x128xf32>
    %5 = arith.addf %3, %4 : vector<16x128xf32>
    %cst_5 = arith.constant 0.000000e+00 : f32
    %6 = vector.broadcast %cst_5 : f32 to vector<16x128xf32>
    %7 = arith.maximumf %5, %6 : vector<16x128xf32>
    %c0_6 = arith.constant 0 : index
    %c0_7 = arith.constant 0 : index
    %8 = vector.load %arg4[%c0_6, %c0_7] : memref<128x128xf32, #tpu.memory_space<vmem>>, vector<128x128xf32>
    %c0_8 = arith.constant 0 : index
    %c0_9 = arith.constant 0 : index
    %9 = vector.load %arg5[%c0_8, %c0_9] : memref<1x128xf32, #tpu.memory_space<vmem>>, vector<1x128xf32>
    %cst_10 = arith.constant dense<0.000000e+00> : vector<16x128xf32>
    %10 = tpu.matmul %7, %8, %cst_10 {dimension_numbers = #tpu.dot_dimension_numbers<[1], [0], [0], [1], [0, 0, 1, 1], [], []>} : vector<16x128xf32>, vector<128x128xf32>, vector<16x128xf32> -> vector<16x128xf32>
    %11 = vector.broadcast %9 : vector<1x128xf32> to vector<16x128xf32>
    %12 = arith.addf %10, %11 : vector<16x128xf32>
    %cst_11 = arith.constant 0.000000e+00 : f32
    %13 = vector.broadcast %cst_11 : f32 to vector<16x128xf32>
    %14 = arith.maximumf %12, %13 : vector<16x128xf32>
    %c0_12 = arith.constant 0 : index
    %c0_13 = arith.constant 0 : index
    %15 = vector.load %arg6[%c0_12, %c0_13] : memref<128x128xf32, #tpu.memory_space<vmem>>, vector<128x128xf32>
    %c0_14 = arith.constant 0 : index
    %c0_15 = arith.constant 0 : index
    %16 = vector.load %arg7[%c0_14, %c0_15] : memref<1x128xf32, #tpu.memory_space<vmem>>, vector<1x128xf32>
    %cst_16 = arith.constant dense<0.000000e+00> : vector<16x128xf32>
    %17 = tpu.matmul %14, %15, %cst_16 {dimension_numbers = #tpu.dot_dimension_numbers<[1], [0], [0], [1], [0, 0, 1, 1], [], []>} : vector<16x128xf32>, vector<128x128xf32>, vector<16x128xf32> -> vector<16x128xf32>
    %18 = vector.broadcast %16 : vector<1x128xf32> to vector<16x128xf32>
    %19 = arith.addf %17, %18 : vector<16x128xf32>
    %c0_17 = arith.constant 0 : index
    %c0_18 = arith.constant 0 : index
    %20 = vector.load %arg8[%c0_17, %c0_18] : memref<16x128xf32, #tpu.memory_space<vmem>>, vector<16x128xf32>
    tpu.vector_store %arg8[%c0_17, %c0_18], %19 {strides = array<i32>} : memref<16x128xf32, #tpu.memory_space<vmem>>, vector<16x128xf32>,
    return
  }
  func.func @transform_0(%arg0: i32) -> (i32, i32) {
    %c0_i32 = arith.constant 0 : i32
    %c0_i32_0 = arith.constant 0 : i32
    return %arg0, %c0_i32 : i32, i32
  }
  func.func @transform_1(%arg0: i32) -> (i32, i32) {
    %c0_i32 = arith.constant 0 : i32
    %c0_i32_0 = arith.constant 0 : i32
    %c0_i32_1 = arith.constant 0 : i32
    return %c0_i32, %c0_i32_0 : i32, i32
  }
  func.func @transform_2(%arg0: i32) -> (i32, i32) {
    %c0_i32 = arith.constant 0 : i32
    %c0_i32_0 = arith.constant 0 : i32
    %c0_i32_1 = arith.constant 0 : i32
    return %c0_i32, %c0_i32_0 : i32, i32
  }
  func.func @transform_3(%arg0: i32) -> (i32, i32) {
    %c0_i32 = arith.constant 0 : i32
    %c0_i32_0 = arith.constant 0 : i32
    %c0_i32_1 = arith.constant 0 : i32
    return %c0_i32, %c0_i32_0 : i32, i32
  }
  func.func @transform_4(%arg0: i32) -> (i32, i32) {
    %c0_i32 = arith.constant 0 : i32
    %c0_i32_0 = arith.constant 0 : i32
    %c0_i32_1 = arith.constant 0 : i32
    return %c0_i32, %c0_i32_0 : i32, i32
  }
  func.func @transform_5(%arg0: i32) -> (i32, i32) {
    %c0_i32 = arith.constant 0 : i32
    %c0_i32_0 = arith.constant 0 : i32
    %c0_i32_1 = arith.constant 0 : i32
    return %c0_i32, %c0_i32_0 : i32, i32
  }
  func.func @transform_6(%arg0: i32) -> (i32, i32) {
    %c0_i32 = arith.constant 0 : i32
    %c0_i32_0 = arith.constant 0 : i32
    %c0_i32_1 = arith.constant 0 : i32
    return %c0_i32, %c0_i32_0 : i32, i32
  }
  func.func @transform_7(%arg0: i32) -> (i32, i32) {
    %c0_i32 = arith.constant 0 : i32
    %c0_i32_0 = arith.constant 0 : i32
    return %arg0, %c0_i32 : i32, i32
  }
}

</mosaic_0001>

<llo_original>
// kernel: neuro_behaviour_forward.1
$region0: #{neuro_behaviour_forward.1}
  #allocation0 [shape = 'u32[]', space=smem, size = 0x4, offset = 0x4, fixed_abs, tag = 'smem constant byte address 0x4 - core index']
  #allocation1 [shape = 'u32[144,128]{1,0:T(1,128)}', space=vmem, size = 0x12000, scoped, tag = 'internal scratch']
  %s0 = inlined_call_operand.vmem [shape: f32[16,128], index: 0, kind: input, shape index: {}]
  %s1 = inlined_call_operand.hbm [shape: f32[128,128], index: 1, kind: input, shape index: {}]
  %s2 = inlined_call_operand.vmem [shape: f32[1,128], index: 2, kind: input, shape index: {}]
  %s3 = inlined_call_operand.hbm [shape: f32[128,128], index: 3, kind: input, shape index: {}]
  %s4 = inlined_call_operand.vmem [shape: f32[1,128], index: 4, kind: input, shape index: {}]
  %s5 = inlined_call_operand.hbm [shape: f32[128,128], index: 5, kind: input, shape index: {}]
  %s6 = inlined_call_operand.vmem [shape: f32[1,128], index: 6, kind: input, shape index: {}]
  %s7 = inlined_call_operand.hbm [shape: f32[16,128], index: 7, kind: output, shape index: {}]
  %s8 = sld [smem:[#allocation0]]
  $region50: #{neuro_behaviour_forward.1} parent=0
    _
  %s10 = ssub.s32 1, %s8
  %s11 = scalar_select 0, %s10, %s8
  $region1: #{neuro_behaviour_forward.1} parent=0
    #allocation2 [shape = 'u8[65536]{0}', space=vmem, size = 0x10000, scoped, tag = 'input window, operand 1, single buffered']
    #allocation3 [shape = 's32[1]{0}', space=sflag, size = 0x4, scoped, tag = 'scoped memory for neuro_behaviour_forward.1']
    #allocation4 [shape = 's32[1]{0}', space=sflag, size = 0x4, scoped, tag = 'scoped memory for neuro_behaviour_forward.1']
    #allocation5 [shape = 'u8[65536]{0}', space=vmem, size = 0x10000, scoped, tag = 'input window, operand 3, single buffered']
    #allocation6 [shape = 's32[1]{0}', space=sflag, size = 0x4, scoped, tag = 'scoped memory for neuro_behaviour_forward.1']
    #allocation7 [shape = 'u8[65536]{0}', space=vmem, size = 0x10000, scoped, tag = 'input window, operand 5, single buffered']
    #allocation8 [shape = 'u8[8192]{0}', space=vmem, size = 0x2000, scoped, tag = 'output window, operand 0, single buffered']
    %12 = vsyncpa [#allocation3], 0
    %13 = vsyncpa [#allocation6], 0
    %14 = vsyncpa [#allocation4], 0
    // Predicated region
    $region2: #{neuro_behaviour_forward.1} parent=1 // pred_check
      _
    $region3: #{neuro_behaviour_forward.1} parent=1 // pred_check_branch
      %16 = sbr.rel (0) target = $region5
    $region4: #{neuro_behaviour_forward.1} parent=1 // pred_region
      _
    $region5: #{neuro_behaviour_forward.1} parent=1 // pred_fallthru
      _
    // Predicated region
    $region6: #{neuro_behaviour_forward.1} parent=1 // pred_check
      _
    $region7: #{neuro_behaviour_forward.1} parent=1 // pred_check_branch
      %18 = sbr.rel (0) target = $region9
    $region8: #{neuro_behaviour_forward.1} parent=1 // pred_region
      %s20 = ssub.s32 2048, 2048
      %21 = vsyncadd [#allocation3], %s20
      %s22 = sshll.u32 [#allocation2], 4
      %s23 = int_to_ptr.vmem [resolvable:$true] %s22
      %28 = dma.hbm_to_vmem [thread:$0]  %s1, 2048, %s23, [#allocation3], 128, 128, 8
    $region9: #{neuro_behaviour_forward.1} parent=1 // pred_fallthru
      _
    // Predicated region
    $region10: #{neuro_behaviour_forward.1} parent=1 // pred_check
      _
    $region11: #{neuro_behaviour_forward.1} parent=1 // pred_check_branch
      %30 = sbr.rel (0) target = $region13
    $region12: #{neuro_behaviour_forward.1} parent=1 // pred_region
      _
    $region13: #{neuro_behaviour_forward.1} parent=1 // pred_fallthru
      _
    // Predicated region
    $region14: #{neuro_behaviour_forward.1} parent=1 // pred_check
      _
    $region15: #{neuro_behaviour_forward.1} parent=1 // pred_check_branch
      %32 = sbr.rel (0) target = $region17
    $region16: #{neuro_behaviour_forward.1} parent=1 // pred_region
      %s34 = ssub.s32 2048, 2048
      %35 = vsyncadd [#allocation6], %s34
      %s36 = sshll.u32 [#allocation5], 4
      %s37 = int_to_ptr.vmem [resolvable:$true] %s36
      %42 = dma.hbm_to_vmem [thread:$0]  %s3, 2048, %s37, [#allocation6], 128, 128, 8
    $region17: #{neuro_behaviour_forward.1} parent=1 // pred_fallthru
      _
    // Predicated region
    $region18: #{neuro_behaviour_forward.1} parent=1 // pred_check
      _
    $region19: #{neuro_behaviour_forward.1} parent=1 // pred_check_branch
      %44 = sbr.rel (0) target = $region21
    $region20: #{neuro_behaviour_forward.1} parent=1 // pred_region
      _
    $region21: #{neuro_behaviour_forward.1} parent=1 // pred_fallthru
      _
    // Predicated region
    $region22: #{neuro_behaviour_forward.1} parent=1 // pred_check
      _
    $region23: #{neuro_behaviour_forward.1} parent=1 // pred_check_branch
      %46 = sbr.rel (0) target = $region25
    $region24: #{neuro_behaviour_forward.1} parent=1 // pred_region
      %s48 = ssub.s32 2048, 2048
      %49 = vsyncadd [#allocation6], %s48
      %s50 = sshll.u32 [#allocation7], 4
      %s51 = int_to_ptr.vmem [resolvable:$true] %s50
      %56 = dma.hbm_to_vmem [thread:$0]  %s5, 2048, %s51, [#allocation6], 128, 128, 8
    $region25: #{neuro_behaviour_forward.1} parent=1 // pred_fallthru
      _
    // Predicated region
    $region26: #{neuro_behaviour_forward.1} parent=1 // pred_check
      _
    $region27: #{neuro_behaviour_forward.1} parent=1 // pred_check_branch
      %58 = sbr.rel (0) target = $region29
    $region28: #{neuro_behaviour_forward.1} parent=1 // pred_region
      _
    $region29: #{neuro_behaviour_forward.1} parent=1 // pred_fallthru
      _
    // Predicated region
    $region30: #{neuro_behaviour_forward.1} parent=1 // pred_check
      _
    $region31: #{neuro_behaviour_forward.1} parent=1 // pred_check_branch
      %60 = sbr.rel (0) target = $region33
    $region32: #{neuro_behaviour_forward.1} parent=1 // pred_region
      %61 = dma.done [#allocation3], 2048
    $region33: #{neuro_behaviour_forward.1} parent=1 // pred_fallthru
      _
    // Predicated region
    $region34: #{neuro_behaviour_forward.1} parent=1 // pred_check
      _
    $region35: #{neuro_behaviour_forward.1} parent=1 // pred_check_branch
      %63 = sbr.rel (0) target = $region37
    $region36: #{neuro_behaviour_forward.1} parent=1 // pred_region
      %64 = dma.done [#allocation6], 2048
    $region37: #{neuro_behaviour_forward.1} parent=1 // pred_fallthru
      _
    // Predicated region
    $region38: #{neuro_behaviour_forward.1} parent=1 // pred_check
      _
    $region39: #{neuro_behaviour_forward.1} parent=1 // pred_check_branch
      %66 = sbr.rel (0) target = $region41
    $region40: #{neuro_behaviour_forward.1} parent=1 // pred_region
      %67 = dma.done [#allocation6], 2048
    $region41: #{neuro_behaviour_forward.1} parent=1 // pred_fallthru
      _
    %v68 = vld [vmem:[%s0] sm:$0xff]
    %v69 = vld [vmem:[%s0 + $0x8] sm:$0xff]
    %v70 = vld [vmem:[#allocation2] sm:$0xff]
    %v71 = vld [vmem:[#allocation2 + $0x8] sm:$0xff]
    %v72 = vld [vmem:[#allocation2 + $0x10] sm:$0xff]
    %v73 = vld [vmem:[#allocation2 + $0x18] sm:$0xff]
    %v74 = vld [vmem:[#allocation2 + $0x20] sm:$0xff]
    %v75 = vld [vmem:[#allocation2 + $0x28] sm:$0xff]
    %v76 = vld [vmem:[#allocation2 + $0x30] sm:$0xff]
    %v77 = vld [vmem:[#allocation2 + $0x38] sm:$0xff]
    %v78 = vld [vmem:[#allocation2 + $0x40] sm:$0xff]
    %v79 = vld [vmem:[#allocation2 + $0x48] sm:$0xff]
    %v80 = vld [vmem:[#allocation2 + $0x50] sm:$0xff]
    %v81 = vld [vmem:[#allocation2 + $0x58] sm:$0xff]
    %v82 = vld [vmem:[#allocation2 + $0x60] sm:$0xff]
    %v83 = vld [vmem:[#allocation2 + $0x68] sm:$0xff]
    %v84 = vld [vmem:[#allocation2 + $0x70] sm:$0xff]
    %v85 = vld [vmem:[#allocation2 + $0x78] sm:$0xff]
    %v86 = vld [vmem:[%s2] sm:$0x1]
    %v88 = vlaneseq
    %v89 = vshrl.u32 %v88, 7
    %v90 = vsub.s32 0, %v89
    %v91 = vrot.slane %v86, %v90
    %93 = vmatprep.subr.mxu0 0.0
    %94 = vmatpush1.msra.mxu0 %v70
    %95 = vmatprep.subr.mxu0 0.0
    %96 = vmatpush1.msra.mxu0 %v71
    %97 = vmatprep.subr.mxu0 0.0
    %98 = vmatpush1.msra.mxu0 %v72
    %99 = vmatprep.subr.mxu0 0.0
    %100 = vmatpush1.msra.mxu0 %v73
    %101 = vmatprep.subr.mxu0 0.0
    %102 = vmatpush1.msra.mxu0 %v74
    %103 = vmatprep.subr.mxu0 0.0
    %104 = vmatpush1.msra.mxu0 %v75
    %105 = vmatprep.subr.mxu0 0.0
    %106 = vmatpush1.msra.mxu0 %v76
    %107 = vmatprep.subr.mxu0 0.0
    %108 = vmatpush1.msra.mxu0 %v77
    %109 = vmatprep.subr.mxu0 0.0
    %110 = vmatpush1.msra.mxu0 %v78
    %111 = vmatprep.subr.mxu0 0.0
    %112 = vmatpush1.msra.mxu0 %v79
    %113 = vmatprep.subr.mxu0 0.0
    %114 = vmatpush1.msra.mxu0 %v80
    %115 = vmatprep.subr.mxu0 0.0
    %116 = vmatpush1.msra.mxu0 %v81
    %117 = vmatprep.subr.mxu0 0.0
    %118 = vmatpush1.msra.mxu0 %v82
    %119 = vmatprep.subr.mxu0 0.0
    %120 = vmatpush1.msra.mxu0 %v83
    %121 = vmatprep.subr.mxu0 0.0
    %122 = vmatpush1.msra.mxu0 %v84
    %123 = vmatprep.subr.mxu0 0.0
    %124 = vmatpush1.msra.mxu0 %v85
    %125 = vmatprep.subr.mxu0 0.0
    %126 = vmatpush1.msra.mxu0 0.0
    %127 = vmatprep.subr.mxu0 0.0
    %128 = vmatpush1.msra.mxu0 0.0
    %129 = vmatprep.subr.mxu0 0.0
    %130 = vmatpush1.msra.mxu0 0.0
    %131 = vmatprep.subr.mxu0 0.0
    %132 = vmatpush1.msra.mxu0 0.0
    %133 = vmatprep.subr.mxu0 0.0
    %134 = vmatpush1.msra.mxu0 0.0
    %135 = vmatprep.subr.mxu0 0.0
    %136 = vmatpush1.msra.mxu0 0.0
    %137 = vmatprep.subr.mxu0 0.0
    %138 = vmatpush1.msra.mxu0 0.0
    %139 = vmatprep.subr.mxu0 0.0
    %140 = vmatpush1.msra.mxu0 0.0
    %141 = vmatprep.subr.mxu0 0.0
    %142 = vmatpush1.msra.mxu0 0.0
    %143 = vmatprep.subr.mxu0 0.0
    %144 = vmatpush1.msra.mxu0 0.0
    %145 = vmatprep.subr.mxu0 0.0
    %146 = vmatpush1.msra.mxu0 0.0
    %147 = vmatprep.subr.mxu0 0.0
    %148 = vmatpush1.msra.mxu0 0.0
    %149 = vmatprep.subr.mxu0 0.0
    %150 = vmatpush1.msra.mxu0 0.0
    %151 = vmatprep.subr.mxu0 0.0
    %152 = vmatpush1.msra.mxu0 0.0
    %153 = vmatprep.subr.mxu0 0.0
    %154 = vmatpush1.msra.mxu0 0.0
    %155 = vmatprep.subr.mxu0 0.0
    %156 = vmatpush1.msra.mxu0 0.0
    %157 = vmatprep.mubr.f32.mxu0 0.0
    %158 = vmatmul.mubr.f32.gmra.mrb[0].mxu0 %v68
    %v159 = vpop.f32.mrb[0].mxu0
    %v160 = vadd.f32 %v91, %v159
    %v161 = vpop.f32.mrb[0].mxu0
    %162 = vmatprep.mubr.f32.mxu0 0.0
    %163 = vmatmul.mubr.f32.gmra.mrb[0].mxu0 %v69
    %v164 = vpop.f32.mrb[0].mxu0
    %v165 = vadd.f32 %v91, %v164
    %v166 = vpop.f32.mrb[0].mxu0
    %167 = vdwg.mxu0
    %v168 = vmax.f32 %v160, 0.0
    %v169 = vmax.f32 %v165, 0.0
    %v170 = vld [vmem:[#allocation5] sm:$0xff]
    %v171 = vld [vmem:[#allocation5 + $0x8] sm:$0xff]
    %v172 = vld [vmem:[#allocation5 + $0x10] sm:$0xff]
    %v173 = vld [vmem:[#allocation5 + $0x18] sm:$0xff]
    %v174 = vld [vmem:[#allocation5 + $0x20] sm:$0xff]
    %v175 = vld [vmem:[#allocation5 + $0x28] sm:$0xff]
    %v176 = vld [vmem:[#allocation5 + $0x30] sm:$0xff]
    %v177 = vld [vmem:[#allocation5 + $0x38] sm:$0xff]
    %v178 = vld [vmem:[#allocation5 + $0x40] sm:$0xff]
    %v179 = vld [vmem:[#allocation5 + $0x48] sm:$0xff]
    %v180 = vld [vmem:[#allocation5 + $0x50] sm:$0xff]
    %v181 = vld [vmem:[#allocation5 + $0x58] sm:$0xff]
    %v182 = vld [vmem:[#allocation5 + $0x60] sm:$0xff]
    %v183 = vld [vmem:[#allocation5 + $0x68] sm:$0xff]
    %v184 = vld [vmem:[#allocation5 + $0x70] sm:$0xff]
    %v185 = vld [vmem:[#allocation5 + $0x78] sm:$0xff]
    %v186 = vld [vmem:[%s4] sm:$0x1]
    %v188 = vlaneseq
    %v189 = vshrl.u32 %v188, 7
    %v190 = vsub.s32 0, %v189
    %v191 = vrot.slane %v186, %v190
    %193 = vmatprep.subr.mxu0 0.0
    %194 = vmatpush1.msra.mxu0 %v170
    %195 = vmatprep.subr.mxu0 0.0
    %196 = vmatpush1.msra.mxu0 %v171
    %197 = vmatprep.subr.mxu0 0.0
    %198 = vmatpush1.msra.mxu0 %v172
    %199 = vmatprep.subr.mxu0 0.0
    %200 = vmatpush1.msra.mxu0 %v173
    %201 = vmatprep.subr.mxu0 0.0
    %202 = vmatpush1.msra.mxu0 %v174
    %203 = vmatprep.subr.mxu0 0.0
    %204 = vmatpush1.msra.mxu0 %v175
    %205 = vmatprep.subr.mxu0 0.0
    %206 = vmatpush1.msra.mxu0 %v176
    %207 = vmatprep.subr.mxu0 0.0
    %208 = vmatpush1.msra.mxu0 %v177
    %209 = vmatprep.subr.mxu0 0.0
    %210 = vmatpush1.msra.mxu0 %v178
    %211 = vmatprep.subr.mxu0 0.0
    %212 = vmatpush1.msra.mxu0 %v179
    %213 = vmatprep.subr.mxu0 0.0
    %214 = vmatpush1.msra.mxu0 %v180
    %215 = vmatprep.subr.mxu0 0.0
    %216 = vmatpush1.msra.mxu0 %v181
    %217 = vmatprep.subr.mxu0 0.0
    %218 = vmatpush1.msra.mxu0 %v182
    %219 = vmatprep.subr.mxu0 0.0
    %220 = vmatpush1.msra.mxu0 %v183
    %221 = vmatprep.subr.mxu0 0.0
    %222 = vmatpush1.msra.mxu0 %v184
    %223 = vmatprep.subr.mxu0 0.0
    %224 = vmatpush1.msra.mxu0 %v185
    %225 = vmatprep.subr.mxu0 0.0
    %226 = vmatpush1.msra.mxu0 0.0
    %227 = vmatprep.subr.mxu0 0.0
    %228 = vmatpush1.msra.mxu0 0.0
    %229 = vmatprep.subr.mxu0 0.0
    %230 = vmatpush1.msra.mxu0 0.0
    %231 = vmatprep.subr.mxu0 0.0
    %232 = vmatpush1.msra.mxu0 0.0
    %233 = vmatprep.subr.mxu0 0.0
    %234 = vmatpush1.msra.mxu0 0.0
    %235 = vmatprep.subr.mxu0 0.0
    %236 = vmatpush1.msra.mxu0 0.0
    %237 = vmatprep.subr.mxu0 0.0
    %238 = vmatpush1.msra.mxu0 0.0
    %239 = vmatprep.subr.mxu0 0.0
    %240 = vmatpush1.msra.mxu0 0.0
    %241 = vmatprep.subr.mxu0 0.0
    %242 = vmatpush1.msra.mxu0 0.0
    %243 = vmatprep.subr.mxu0 0.0
    %244 = vmatpush1.msra.mxu0 0.0
    %245 = vmatprep.subr.mxu0 0.0
    %246 = vmatpush1.msra.mxu0 0.0
    %247 = vmatprep.subr.mxu0 0.0
    %248 = vmatpush1.msra.mxu0 0.0
    %249 = vmatprep.subr.mxu0 0.0
    %250 = vmatpush1.msra.mxu0 0.0
    %251 = vmatprep.subr.mxu0 0.0
    %252 = vmatpush1.msra.mxu0 0.0
    %253 = vmatprep.subr.mxu0 0.0
    %254 = vmatpush1.msra.mxu0 0.0
    %255 = vmatprep.subr.mxu0 0.0
    %256 = vmatpush1.msra.mxu0 0.0
    %257 = vmatprep.mubr.f32.mxu0 0.0
    %258 = vmatmul.mubr.f32.gmra.mrb[0].mxu0 %v168
    %v259 = vpop.f32.mrb[0].mxu0
    %v260 = vadd.f32 %v191, %v259
    %v261 = vpop.f32.mrb[0].mxu0
    %262 = vmatprep.mubr.f32.mxu0 0.0
    %263 = vmatmul.mubr.f32.gmra.mrb[0].mxu0 %v169
    %v264 = vpop.f32.mrb[0].mxu0
    %v265 = vadd.f32 %v191, %v264
    %v266 = vpop.f32.mrb[0].mxu0
    %267 = vdwg.mxu0
    %v268 = vmax.f32 %v260, 0.0
    %v269 = vmax.f32 %v265, 0.0
    %v270 = vld [vmem:[#allocation7] sm:$0xff]
    %v271 = vld [vmem:[#allocation7 + $0x8] sm:$0xff]
    %v272 = vld [vmem:[#allocation7 + $0x10] sm:$0xff]
    %v273 = vld [vmem:[#allocation7 + $0x18] sm:$0xff]
    %v274 = vld [vmem:[#allocation7 + $0x20] sm:$0xff]
    %v275 = vld [vmem:[#allocation7 + $0x28] sm:$0xff]
    %v276 = vld [vmem:[#allocation7 + $0x30] sm:$0xff]
    %v277 = vld [vmem:[#allocation7 + $0x38] sm:$0xff]
    %v278 = vld [vmem:[#allocation7 + $0x40] sm:$0xff]
    %v279 = vld [vmem:[#allocation7 + $0x48] sm:$0xff]
    %v280 = vld [vmem:[#allocation7 + $0x50] sm:$0xff]
    %v281 = vld [vmem:[#allocation7 + $0x58] sm:$0xff]
    %v282 = vld [vmem:[#allocation7 + $0x60] sm:$0xff]
    %v283 = vld [vmem:[#allocation7 + $0x68] sm:$0xff]
    %v284 = vld [vmem:[#allocation7 + $0x70] sm:$0xff]
    %v285 = vld [vmem:[#allocation7 + $0x78] sm:$0xff]
    %v286 = vld [vmem:[%s6] sm:$0x1]
    %v288 = vlaneseq
    %v289 = vshrl.u32 %v288, 7
    %v290 = vsub.s32 0, %v289
    %v291 = vrot.slane %v286, %v290
    %293 = vmatprep.subr.mxu0 0.0
    %294 = vmatpush1.msra.mxu0 %v270
    %295 = vmatprep.subr.mxu0 0.0
    %296 = vmatpush1.msra.mxu0 %v271
    %297 = vmatprep.subr.mxu0 0.0
    %298 = vmatpush1.msra.mxu0 %v272
    %299 = vmatprep.subr.mxu0 0.0
    %300 = vmatpush1.msra.mxu0 %v273
    %301 = vmatprep.subr.mxu0 0.0
    %302 = vmatpush1.msra.mxu0 %v274
    %303 = vmatprep.subr.mxu0 0.0
    %304 = vmatpush1.msra.mxu0 %v275
    %305 = vmatprep.subr.mxu0 0.0
    %306 = vmatpush1.msra.mxu0 %v276
    %307 = vmatprep.subr.mxu0 0.0
    %308 = vmatpush1.msra.mxu0 %v277
    %309 = vmatprep.subr.mxu0 0.0
    %310 = vmatpush1.msra.mxu0 %v278
    %311 = vmatprep.subr.mxu0 0.0
    %312 = vmatpush1.msra.mxu0 %v279
    %313 = vmatprep.subr.mxu0 0.0
    %314 = vmatpush1.msra.mxu0 %v280
    %315 = vmatprep.subr.mxu0 0.0
    %316 = vmatpush1.msra.mxu0 %v281
    %317 = vmatprep.subr.mxu0 0.0
    %318 = vmatpush1.msra.mxu0 %v282
    %319 = vmatprep.subr.mxu0 0.0
    %320 = vmatpush1.msra.mxu0 %v283
    %321 = vmatprep.subr.mxu0 0.0
    %322 = vmatpush1.msra.mxu0 %v284
    %323 = vmatprep.subr.mxu0 0.0
    %324 = vmatpush1.msra.mxu0 %v285
    %325 = vmatprep.subr.mxu0 0.0
    %326 = vmatpush1.msra.mxu0 0.0
    %327 = vmatprep.subr.mxu0 0.0
    %328 = vmatpush1.msra.mxu0 0.0
    %329 = vmatprep.subr.mxu0 0.0
    %330 = vmatpush1.msra.mxu0 0.0
    %331 = vmatprep.subr.mxu0 0.0
    %332 = vmatpush1.msra.mxu0 0.0
    %333 = vmatprep.subr.mxu0 0.0
    %334 = vmatpush1.msra.mxu0 0.0
    %335 = vmatprep.subr.mxu0 0.0
    %336 = vmatpush1.msra.mxu0 0.0
    %337 = vmatprep.subr.mxu0 0.0
    %338 = vmatpush1.msra.mxu0 0.0
    %339 = vmatprep.subr.mxu0 0.0
    %340 = vmatpush1.msra.mxu0 0.0
    %341 = vmatprep.subr.mxu0 0.0
    %342 = vmatpush1.msra.mxu0 0.0
    %343 = vmatprep.subr.mxu0 0.0
    %344 = vmatpush1.msra.mxu0 0.0
    %345 = vmatprep.subr.mxu0 0.0
    %346 = vmatpush1.msra.mxu0 0.0
    %347 = vmatprep.subr.mxu0 0.0
    %348 = vmatpush1.msra.mxu0 0.0
    %349 = vmatprep.subr.mxu0 0.0
    %350 = vmatpush1.msra.mxu0 0.0
    %351 = vmatprep.subr.mxu0 0.0
    %352 = vmatpush1.msra.mxu0 0.0
    %353 = vmatprep.subr.mxu0 0.0
    %354 = vmatpush1.msra.mxu0 0.0
    %355 = vmatprep.subr.mxu0 0.0
    %356 = vmatpush1.msra.mxu0 0.0
    %357 = vmatprep.mubr.f32.mxu0 0.0
    %358 = vmatmul.mubr.f32.gmra.mrb[0].mxu0 %v268
    %v359 = vpop.f32.mrb[0].mxu0
    %v360 = vadd.f32 %v291, %v359
    %v361 = vpop.f32.mrb[0].mxu0
    %362 = vmatprep.mubr.f32.mxu0 0.0
    %363 = vmatmul.mubr.f32.gmra.mrb[0].mxu0 %v269
    %v364 = vpop.f32.mrb[0].mxu0
    %v365 = vadd.f32 %v291, %v364
    %v366 = vpop.f32.mrb[0].mxu0
    %367 = vdwg.mxu0
    %368 = vst [vmem:[#allocation8] sm:$0xff] %v360
    %369 = vst [vmem:[#allocation8 + $0x8] sm:$0xff] %v365
    // Predicated region
    $region42: #{neuro_behaviour_forward.1} parent=1 // pred_check
      _
    $region43: #{neuro_behaviour_forward.1} parent=1 // pred_check_branch
      %371 = sbr.rel (0) target = $region45
    $region44: #{neuro_behaviour_forward.1} parent=1 // pred_region
      %s373 = ssub.s32 256, 256
      %374 = vsyncadd [#allocation4], %s373
      %s375 = sshll.u32 [#allocation8], 4
      %s376 = int_to_ptr.vmem [resolvable:$true] %s375
      %381 = dma.vmem_to_hbm [thread:$0]  %s376, 256, %s7, [#allocation4], 128, 128, 8
    $region45: #{neuro_behaviour_forward.1} parent=1 // pred_fallthru
      _
    // Predicated region
    $region46: #{neuro_behaviour_forward.1} parent=1 // pred_check
      _
    $region47: #{neuro_behaviour_forward.1} parent=1 // pred_check_branch
      %383 = sbr.rel (0) target = $region49
    $region48: #{neuro_behaviour_forward.1} parent=1 // pred_region
      %384 = dma.done [#allocation4], 256
    $region49: #{neuro_behaviour_forward.1} parent=1 // pred_fallthru
      _
    %385 = vsyncpa [#allocation3], 1
    %386 = vsyncpa [#allocation6], 1
    %387 = vsyncpa [#allocation4], 1

</llo_original>
